<compile_context>
chip_gen: v7x
topology: tpu7x:2x2x1
jax: 0.10.0
libtpu: 0.0.40
codegen_flags: <defaults>
</compile_context>

<pallas_src>
import jax
import jax.numpy as jnp
from jax.experimental import pallas as pl
from jax.experimental.pallas import tpu as pltpu

HIDDEN_SIZE = 128
DEFAULT_TILE_B = 1024  # rows per grid step (multiple of 8; fills the MXU M dim)


def _round_up(n, m):
    return ((n + m - 1) // m) * m


def _valuenet_kernel(x_ref, w1_ref, b1_ref, w2_ref, b2_ref, w3_ref, b3_ref, o_ref):
    bf16 = jnp.bfloat16

    # Layer 1: Linear(state_size, HIDDEN) + ReLU  (bf16 MXU operands, f32 accum)
    h1 = jnp.dot(
        x_ref[...].astype(bf16), w1_ref[...].astype(bf16),
        preferred_element_type=jnp.float32,
    ) + b1_ref[...]
    h1 = jnp.maximum(h1, 0.0)

    # Layer 2: Linear(HIDDEN, HIDDEN) + ReLU
    h2 = jnp.dot(
        h1.astype(bf16), w2_ref[...].astype(bf16),
        preferred_element_type=jnp.float32,
    ) + b2_ref[...]
    h2 = jnp.maximum(h2, 0.0)

    # Layer 3: Linear(HIDDEN, 1) as VPU mul + XLU reduce (avoids N=1 MXU matmul).
    o_ref[...] = jnp.sum(h2 * w3_ref[...], axis=-1, keepdims=True) + b3_ref[...]


def value_net_forward(x, params, *, tile_b=DEFAULT_TILE_B):
    """x: [B, state_size] float32 -> [B, 1] float32."""
    w1, b1, w2, b2, w3, b3 = params
    B, state_size = x.shape

    # Keep the batch tile a multiple of 8 (sublane axis) and no larger than needed.
    tile_b = min(tile_b, _round_up(B, 8))
    grid = (pl.cdiv(B, tile_b),)

    def const_spec(a):
        nd = a.ndim
        return pl.BlockSpec(a.shape, lambda i, _nd=nd: (0,) * _nd)

    flops = 2 * B * (state_size * HIDDEN_SIZE + HIDDEN_SIZE * HIDDEN_SIZE + HIDDEN_SIZE)
    weight_bytes = sum(int(p.size) * p.dtype.itemsize for p in params)
    bytes_accessed = B * (state_size + 1) * 4 + weight_bytes

    return pl.pallas_call(
        _valuenet_kernel,
        out_shape=jax.ShapeDtypeStruct((B, 1), jnp.float32),
        grid=grid,
        in_specs=[
            pl.BlockSpec((tile_b, state_size), lambda i: (i, 0)),  # x: streamed by batch tile
            const_spec(w1), const_spec(b1),                        # weights/biases: resident
            const_spec(w2), const_spec(b2),
            const_spec(w3), const_spec(b3),
        ],
        out_specs=pl.BlockSpec((tile_b, 1), lambda i: (i, 0)),
        compiler_params=pltpu.CompilerParams(
            dimension_semantics=("parallel",),
        ),
        cost_estimate=pl.CostEstimate(
            flops=flops, transcendentals=0, bytes_accessed=bytes_accessed
        ),
    )(x, w1, b1, w2, b2, w3, b3)


def init_params(key, state_size):
    """Deterministic init mimicking PyTorch nn.Linear default (U[-1/sqrt(fan_in), 1/sqrt(fan_in)])."""
    ks = jax.random.split(key, 6)

    def linear(kw, kb, fan_in, fan_out):
        bound = 1.0 / jnp.sqrt(jnp.float32(fan_in))
        w = jax.random.uniform(kw, (fan_in, fan_out), jnp.float32, -bound, bound)
        b = jax.random.uniform(kb, (1, fan_out), jnp.float32, -bound, bound)
        return w, b

    w1, b1 = linear(ks[0], ks[1], state_size, HIDDEN_SIZE)
    w2, b2 = linear(ks[2], ks[3], HIDDEN_SIZE, HIDDEN_SIZE)
    w3_col, b3_col = linear(ks[4], ks[5], HIDDEN_SIZE, 1)
    # Store the output head as a [1, HIDDEN] row for the in-kernel VPU/XLU reduction.
    w3 = w3_col.T                      # [1, HIDDEN]
    b3 = b3_col.reshape(1, 1)          # [1, 1]
    return (w1, b1, w2, b2, w3, b3)


def _reference_f32(x, params):
    """Exact f32 forward (matches the PyTorch module semantics)."""
    w1, b1, w2, b2, w3, b3 = params
    h1 = jnp.maximum(x @ w1 + b1, 0.0)
    h2 = jnp.maximum(h1 @ w2 + b2, 0.0)
    return jnp.sum(h2 * w3, axis=-1, keepdims=True) + b3


def _reference_bf16(x, params):
    """Reference replicating the kernel's bf16-at-the-dot / f32-accumulate math."""
    w1, b1, w2, b2, w3, b3 = params
    bf = jnp.bfloat16
    h1 = jnp.maximum(
        jnp.dot(x.astype(bf), w1.astype(bf), preferred_element_type=jnp.float32) + b1, 0.0)
    h2 = jnp.maximum(
        jnp.dot(h1.astype(bf), w2.astype(bf), preferred_element_type=jnp.float32) + b2, 0.0)
    return jnp.sum(h2 * w3, axis=-1, keepdims=True) + b3


if __name__ == "__main__":
    key = jax.random.PRNGKey(0)
    k_param, k_x_small, k_x_big = jax.random.split(key, 3)

    state_size = 32  # small CartPole-like observation, padded to a multiple of 8
    params = init_params(k_param, state_size)

    # Small single-block case (B=8 -> one grid step).
    x_small = jax.random.normal(k_x_small, (8, state_size), dtype=jnp.float32)
    out_small = jax.block_until_ready(value_net_forward(x_small, params))
    assert out_small.shape == (8, 1)
    assert jnp.allclose(out_small, _reference_bf16(x_small, params), atol=1e-3, rtol=1e-3), \
        "mismatch vs bf16 reference (small batch)"
    assert jnp.allclose(out_small, _reference_f32(x_small, params), atol=5e-2, rtol=5e-2), \
        "mismatch vs f32 reference (small batch)"

    # Multi-block case exercising the batch grid and a ragged final tile.
    x_big = jax.random.normal(k_x_big, (1000, state_size), dtype=jnp.float32)
    out_big = jax.block_until_ready(value_net_forward(x_big, params, tile_b=512))
    assert out_big.shape == (1000, 1)
    assert jnp.allclose(out_big, _reference_bf16(x_big, params), atol=1e-3, rtol=1e-3), \
        "mismatch vs bf16 reference (gridded batch)"
    assert jnp.allclose(out_big, _reference_f32(x_big, params), atol=5e-2, rtol=5e-2), \
        "mismatch vs f32 reference (gridded batch)"

    print("KERNEL_OK")
</pallas_src>

<mosaic_0001>
module attributes {stable_mosaic.version = 11 : i64} {
  func.func @_valuenet_kernel(%arg0: i32, %arg1: memref<8x32xf32, #tpu.memory_space<vmem>>, %arg2: memref<32x128xf32, #tpu.memory_space<vmem>>, %arg3: memref<1x128xf32, #tpu.memory_space<vmem>>, %arg4: memref<128x128xf32, #tpu.memory_space<vmem>>, %arg5: memref<1x128xf32, #tpu.memory_space<vmem>>, %arg6: memref<1x128xf32, #tpu.memory_space<vmem>>, %arg7: memref<1x1xf32, #tpu.memory_space<vmem>>, %arg8: memref<8x1xf32, #tpu.memory_space<vmem>>) attributes {dimension_semantics = [#tpu.dimension_semantics<parallel>], iteration_bounds = array<i64: 1>, scalar_prefetch = 0 : i64, scratch_operands = 0 : i64, tpu.core_type = #tpu.core_type<tc>, window_params = [{transform_indices = @transform_0, window_bounds = array<i64: 8, 32>}, {pipeline_mode = #tpu.pipeline_mode<synchronous>, transform_indices = @transform_1, window_bounds = array<i64: 32, 128>}, {pipeline_mode = #tpu.pipeline_mode<synchronous>, transform_indices = @transform_2, window_bounds = array<i64: 1, 128>}, {pipeline_mode = #tpu.pipeline_mode<synchronous>, transform_indices = @transform_3, window_bounds = array<i64: 128, 128>}, {pipeline_mode = #tpu.pipeline_mode<synchronous>, transform_indices = @transform_4, window_bounds = array<i64: 1, 128>}, {pipeline_mode = #tpu.pipeline_mode<synchronous>, transform_indices = @transform_5, window_bounds = array<i64: 1, 128>}, {pipeline_mode = #tpu.pipeline_mode<synchronous>, transform_indices = @transform_6, window_bounds = array<i64: 1, 1>}, {transform_indices = @transform_7, window_bounds = array<i64: 8, 1>}]} {
    %c0 = arith.constant 0 : index
    %c0_0 = arith.constant 0 : index
    %0 = vector.load %arg1[%c0, %c0_0] : memref<8x32xf32, #tpu.memory_space<vmem>>, vector<8x32xf32>
    %1 = arith.truncf %0 : vector<8x32xf32> to vector<8x32xbf16>
    %c0_1 = arith.constant 0 : index
    %c0_2 = arith.constant 0 : index
    %2 = vector.load %arg2[%c0_1, %c0_2] : memref<32x128xf32, #tpu.memory_space<vmem>>, vector<32x128xf32>
    %3 = arith.truncf %2 : vector<32x128xf32> to vector<32x128xbf16>
    %cst = arith.constant dense<0.000000e+00> : vector<8x128xf32>
    %4 = tpu.matmul %1, %3, %cst {dimension_numbers = #tpu.dot_dimension_numbers<[1], [0], [0], [1], [0, 0, 1, 1], [], []>} : vector<8x32xbf16>, vector<32x128xbf16>, vector<8x128xf32> -> vector<8x128xf32>
    %c0_3 = arith.constant 0 : index
    %c0_4 = arith.constant 0 : index
    %5 = vector.load %arg3[%c0_3, %c0_4] : memref<1x128xf32, #tpu.memory_space<vmem>>, vector<1x128xf32>
    %6 = vector.broadcast %5 : vector<1x128xf32> to vector<8x128xf32>
    %7 = arith.addf %4, %6 : vector<8x128xf32>
    %cst_5 = arith.constant 0.000000e+00 : f32
    %8 = vector.broadcast %cst_5 : f32 to vector<8x128xf32>
    %9 = arith.maximumf %7, %8 : vector<8x128xf32>
    %10 = arith.truncf %9 : vector<8x128xf32> to vector<8x128xbf16>
    %c0_6 = arith.constant 0 : index
    %c0_7 = arith.constant 0 : index
    %11 = vector.load %arg4[%c0_6, %c0_7] : memref<128x128xf32, #tpu.memory_space<vmem>>, vector<128x128xf32>
    %12 = arith.truncf %11 : vector<128x128xf32> to vector<128x128xbf16>
    %cst_8 = arith.constant dense<0.000000e+00> : vector<8x128xf32>
    %13 = tpu.matmul %10, %12, %cst_8 {dimension_numbers = #tpu.dot_dimension_numbers<[1], [0], [0], [1], [0, 0, 1, 1], [], []>} : vector<8x128xbf16>, vector<128x128xbf16>, vector<8x128xf32> -> vector<8x128xf32>
    %c0_9 = arith.constant 0 : index
    %c0_10 = arith.constant 0 : index
    %14 = vector.load %arg5[%c0_9, %c0_10] : memref<1x128xf32, #tpu.memory_space<vmem>>, vector<1x128xf32>
    %15 = vector.broadcast %14 : vector<1x128xf32> to vector<8x128xf32>
    %16 = arith.addf %13, %15 : vector<8x128xf32>
    %cst_11 = arith.constant 0.000000e+00 : f32
    %17 = vector.broadcast %cst_11 : f32 to vector<8x128xf32>
    %18 = arith.maximumf %16, %17 : vector<8x128xf32>
    %c0_12 = arith.constant 0 : index
    %c0_13 = arith.constant 0 : index
    %19 = vector.load %arg6[%c0_12, %c0_13] : memref<1x128xf32, #tpu.memory_space<vmem>>, vector<1x128xf32>
    %20 = vector.broadcast %19 : vector<1x128xf32> to vector<8x128xf32>
    %21 = arith.mulf %18, %20 : vector<8x128xf32>
    %cst_14 = arith.constant dense<0.000000e+00> : vector<8xf32>
    %22 = vector.multi_reduction <add>, %21, %cst_14 [1] : vector<8x128xf32> to vector<8xf32>
    %23 = vector.shape_cast %22 : vector<8xf32> to vector<8x1xf32>
    %c0_15 = arith.constant 0 : index
    %c0_16 = arith.constant 0 : index
    %24 = vector.load %arg7[%c0_15, %c0_16] : memref<1x1xf32, #tpu.memory_space<vmem>>, vector<1x1xf32>
    %25 = vector.broadcast %24 : vector<1x1xf32> to vector<8x1xf32>
    %26 = arith.addf %23, %25 : vector<8x1xf32>
    %c0_17 = arith.constant 0 : index
    %c0_18 = arith.constant 0 : index
    %27 = vector.load %arg8[%c0_17, %c0_18] : memref<8x1xf32, #tpu.memory_space<vmem>>, vector<8x1xf32>
    tpu.vector_store %arg8[%c0_17, %c0_18], %26 {strides = array<i32>} : memref<8x1xf32, #tpu.memory_space<vmem>>, vector<8x1xf32>,
    return
  }
  func.func @transform_0(%arg0: i32) -> (i32, i32) {
    %c0_i32 = arith.constant 0 : i32
    %c0_i32_0 = arith.constant 0 : i32
    return %arg0, %c0_i32 : i32, i32
  }
  func.func @transform_1(%arg0: i32) -> (i32, i32) {
    %c0_i32 = arith.constant 0 : i32
    %c0_i32_0 = arith.constant 0 : i32
    %c0_i32_1 = arith.constant 0 : i32
    return %c0_i32, %c0_i32_0 : i32, i32
  }
  func.func @transform_2(%arg0: i32) -> (i32, i32) {
    %c0_i32 = arith.constant 0 : i32
    %c0_i32_0 = arith.constant 0 : i32
    %c0_i32_1 = arith.constant 0 : i32
    return %c0_i32, %c0_i32_0 : i32, i32
  }
  func.func @transform_3(%arg0: i32) -> (i32, i32) {
    %c0_i32 = arith.constant 0 : i32
    %c0_i32_0 = arith.constant 0 : i32
    %c0_i32_1 = arith.constant 0 : i32
    return %c0_i32, %c0_i32_0 : i32, i32
  }
  func.func @transform_4(%arg0: i32) -> (i32, i32) {
    %c0_i32 = arith.constant 0 : i32
    %c0_i32_0 = arith.constant 0 : i32
    %c0_i32_1 = arith.constant 0 : i32
    return %c0_i32, %c0_i32_0 : i32, i32
  }
  func.func @transform_5(%arg0: i32) -> (i32, i32) {
    %c0_i32 = arith.constant 0 : i32
    %c0_i32_0 = arith.constant 0 : i32
    %c0_i32_1 = arith.constant 0 : i32
    return %c0_i32, %c0_i32_0 : i32, i32
  }
  func.func @transform_6(%arg0: i32) -> (i32, i32) {
    %c0_i32 = arith.constant 0 : i32
    %c0_i32_0 = arith.constant 0 : i32
    %c0_i32_1 = arith.constant 0 : i32
    return %c0_i32, %c0_i32_0 : i32, i32
  }
  func.func @transform_7(%arg0: i32) -> (i32, i32) {
    %c0_i32 = arith.constant 0 : i32
    %c0_i32_0 = arith.constant 0 : i32
    return %arg0, %c0_i32 : i32, i32
  }
}

</mosaic_0001>

<llo_original>
// kernel: tpu_custom_call.1
$region0: #{tpu_custom_call.1}
  #allocation0 [shape = 'u32[]', space=smem, size = 0x4, offset = 0x4, fixed_abs, tag = 'smem constant byte address 0x4 - core index']
  #allocation1 [shape = 'u32[144,128]{1,0:T(1,128)}', space=vmem, size = 0x12000, scoped, tag = 'internal scratch']
  #allocation2 [shape = 'f32[1,1]{1,0:T(1,128)S(1)}', space=vmem, size = 0x200, scoped, tag = 'scoped memory for tpu_custom_call.1']
  %s0 = inlined_call_operand.hbm [shape: f32[8,32], index: 0, kind: input, shape index: {}]
  %s1 = inlined_call_operand.hbm [shape: f32[32,128], index: 1, kind: input, shape index: {}]
  %s2 = inlined_call_operand.vmem [shape: f32[1,128], index: 2, kind: input, shape index: {}]
  %s3 = inlined_call_operand.hbm [shape: f32[128,128], index: 3, kind: input, shape index: {}]
  %s4 = inlined_call_operand.vmem [shape: f32[1,128], index: 4, kind: input, shape index: {}]
  %s5 = inlined_call_operand.vmem [shape: f32[1,128], index: 5, kind: input, shape index: {}]
  %s6 = inlined_call_operand.<no memory space> [shape: f32[1,1], index: 6, kind: input, shape index: {}]
  %s7 = inlined_call_operand.vmem [shape: f32[8,1], index: 7, kind: output, shape index: {}]
  %s8 = sld [smem:[#allocation0]]
  $region50: #{tpu_custom_call.1} parent=0
    _
  %s10 = ssub.s32 1, %s8
  %s11 = scalar_select 0, %s10, %s8
  %v12 = vstv %s6
  %13 = vst [vmem:[#allocation2] sm:$0x1] %v12
  $region1: #{tpu_custom_call.1} parent=0
    #allocation3 [shape = 'u8[4096]{0}', space=vmem, size = 0x1000, scoped, tag = 'input window, operand 0, single buffered']
    #allocation4 [shape = 's32[1]{0}', space=sflag, size = 0x4, scoped, tag = 'scoped memory for tpu_custom_call.1']
    #allocation5 [shape = 'u8[16384]{0}', space=vmem, size = 0x4000, scoped, tag = 'input window, operand 1, single buffered']
    #allocation6 [shape = 's32[1]{0}', space=sflag, size = 0x4, scoped, tag = 'scoped memory for tpu_custom_call.1']
    #allocation7 [shape = 'u8[65536]{0}', space=vmem, size = 0x10000, scoped, tag = 'input window, operand 3, single buffered']
    %14 = vsyncpa [#allocation4], 0
    %15 = vsyncpa [#allocation6], 0
    // Predicated region
    $region2: #{tpu_custom_call.1} parent=1 // pred_check
      _
    $region3: #{tpu_custom_call.1} parent=1 // pred_check_branch
      %17 = sbr.rel (0) target = $region5
    $region4: #{tpu_custom_call.1} parent=1 // pred_region
      %s19 = ssub.s32 128, 128
      %20 = vsyncadd [#allocation4], %s19
      %s22 = sshll.u32 [#allocation3], 4
      %s23 = int_to_ptr.vmem [resolvable:$true] %s22
      %25 = dma.hbm_to_vmem [thread:$0]  %s0, 128, %s23, [#allocation4]
    $region5: #{tpu_custom_call.1} parent=1 // pred_fallthru
      _
    // Predicated region
    $region6: #{tpu_custom_call.1} parent=1 // pred_check
      _
    $region7: #{tpu_custom_call.1} parent=1 // pred_check_branch
      %27 = sbr.rel (0) target = $region9
    $region8: #{tpu_custom_call.1} parent=1 // pred_region
      %s29 = ssub.s32 512, 512
      %30 = vsyncadd [#allocation6], %s29
      %s31 = sshll.u32 [#allocation5], 4
      %s32 = int_to_ptr.vmem [resolvable:$true] %s31
      %37 = dma.hbm_to_vmem [thread:$0]  %s1, 512, %s32, [#allocation6], 128, 128, 8
    $region9: #{tpu_custom_call.1} parent=1 // pred_fallthru
      _
    // Predicated region
    $region10: #{tpu_custom_call.1} parent=1 // pred_check
      _
    $region11: #{tpu_custom_call.1} parent=1 // pred_check_branch
      %39 = sbr.rel (0) target = $region13
    $region12: #{tpu_custom_call.1} parent=1 // pred_region
      _
    $region13: #{tpu_custom_call.1} parent=1 // pred_fallthru
      _
    // Predicated region
    $region14: #{tpu_custom_call.1} parent=1 // pred_check
      _
    $region15: #{tpu_custom_call.1} parent=1 // pred_check_branch
      %41 = sbr.rel (0) target = $region17
    $region16: #{tpu_custom_call.1} parent=1 // pred_region
      %s43 = ssub.s32 2048, 2048
      %44 = vsyncadd [#allocation6], %s43
      %s45 = sshll.u32 [#allocation7], 4
      %s46 = int_to_ptr.vmem [resolvable:$true] %s45
      %51 = dma.hbm_to_vmem [thread:$0]  %s3, 2048, %s46, [#allocation6], 128, 128, 8
    $region17: #{tpu_custom_call.1} parent=1 // pred_fallthru
      _
    // Predicated region
    $region18: #{tpu_custom_call.1} parent=1 // pred_check
      _
    $region19: #{tpu_custom_call.1} parent=1 // pred_check_branch
      %53 = sbr.rel (0) target = $region21
    $region20: #{tpu_custom_call.1} parent=1 // pred_region
      _
    $region21: #{tpu_custom_call.1} parent=1 // pred_fallthru
      _
    // Predicated region
    $region22: #{tpu_custom_call.1} parent=1 // pred_check
      _
    $region23: #{tpu_custom_call.1} parent=1 // pred_check_branch
      %55 = sbr.rel (0) target = $region25
    $region24: #{tpu_custom_call.1} parent=1 // pred_region
      _
    $region25: #{tpu_custom_call.1} parent=1 // pred_fallthru
      _
    // Predicated region
    $region26: #{tpu_custom_call.1} parent=1 // pred_check
      _
    $region27: #{tpu_custom_call.1} parent=1 // pred_check_branch
      %57 = sbr.rel (0) target = $region29
    $region28: #{tpu_custom_call.1} parent=1 // pred_region
      _
    $region29: #{tpu_custom_call.1} parent=1 // pred_fallthru
      _
    // Predicated region
    $region30: #{tpu_custom_call.1} parent=1 // pred_check
      _
    $region31: #{tpu_custom_call.1} parent=1 // pred_check_branch
      %59 = sbr.rel (0) target = $region33
    $region32: #{tpu_custom_call.1} parent=1 // pred_region
      %60 = dma.done [#allocation4], 128
    $region33: #{tpu_custom_call.1} parent=1 // pred_fallthru
      _
    // Predicated region
    $region34: #{tpu_custom_call.1} parent=1 // pred_check
      _
    $region35: #{tpu_custom_call.1} parent=1 // pred_check_branch
      %62 = sbr.rel (0) target = $region37
    $region36: #{tpu_custom_call.1} parent=1 // pred_region
      %63 = dma.done [#allocation6], 512
    $region37: #{tpu_custom_call.1} parent=1 // pred_fallthru
      _
    // Predicated region
    $region38: #{tpu_custom_call.1} parent=1 // pred_check
      _
    $region39: #{tpu_custom_call.1} parent=1 // pred_check_branch
      %65 = sbr.rel (0) target = $region41
    $region40: #{tpu_custom_call.1} parent=1 // pred_region
      %66 = dma.done [#allocation6], 2048
    $region41: #{tpu_custom_call.1} parent=1 // pred_fallthru
      _
    %v68 = vld [vmem:[#allocation3] sm:$0xff]
    %v69 = vpack.c.bf16 %v68, %v68
    %v70 = vld [vmem:[#allocation5] sm:$0xff]
    %v71 = vld [vmem:[#allocation5 + $0x8] sm:$0xff]
    %v72 = vld [vmem:[#allocation5 + $0x10] sm:$0xff]
    %v73 = vld [vmem:[#allocation5 + $0x18] sm:$0xff]
    %v74 = vpack.c.bf16 %v71, %v70
    %v75 = vpack.c.bf16 %v73, %v72
    %v76 = vld [vmem:[%s2] sm:$0x1]
    %v78 = vlaneseq
    %v79 = vshrl.u32 %v78, 7
    %v80 = vsub.s32 0, %v79
    %v81 = vrot.slane %v76, %v80
    %vm83 = vcmask 261120
    %v85 = vsel %vm83, %v69, 0
    %87 = vmatprep.subr.bf16.mxu0 0
    %88 = vmatpush1.bf16.msra.mxu0 %v74
    %89 = vmatprep.subr.bf16.mxu0 0
    %90 = vmatpush1.bf16.msra.mxu0 %v75
    %91 = vmatprep.subr.bf16.mxu0 0
    %92 = vmatpush1.bf16.msra.mxu0 0
    %93 = vmatprep.subr.bf16.mxu0 0
    %94 = vmatpush1.bf16.msra.mxu0 0
    %95 = vmatprep.subr.bf16.mxu0 0
    %96 = vmatpush1.bf16.msra.mxu0 0
    %97 = vmatprep.subr.bf16.mxu0 0
    %98 = vmatpush1.bf16.msra.mxu0 0
    %99 = vmatprep.subr.bf16.mxu0 0
    %100 = vmatpush1.bf16.msra.mxu0 0
    %101 = vmatprep.subr.bf16.mxu0 0
    %102 = vmatpush1.bf16.msra.mxu0 0
    %103 = vmatprep.subr.bf16.mxu0 0
    %104 = vmatpush1.bf16.msra.mxu0 0
    %105 = vmatprep.subr.bf16.mxu0 0
    %106 = vmatpush1.bf16.msra.mxu0 0
    %107 = vmatprep.subr.bf16.mxu0 0
    %108 = vmatpush1.bf16.msra.mxu0 0
    %109 = vmatprep.subr.bf16.mxu0 0
    %110 = vmatpush1.bf16.msra.mxu0 0
    %111 = vmatprep.subr.bf16.mxu0 0
    %112 = vmatpush1.bf16.msra.mxu0 0
    %113 = vmatprep.subr.bf16.mxu0 0
    %114 = vmatpush1.bf16.msra.mxu0 0
    %115 = vmatprep.subr.bf16.mxu0 0
    %116 = vmatpush1.bf16.msra.mxu0 0
    %117 = vmatprep.subr.bf16.mxu0 0
    %118 = vmatpush1.bf16.msra.mxu0 0
    %119 = vmatprep.mubr.bf16.mxu0 0
    %120 = vmatmul.mubr.bf16.gmra.mrb[0].mxu0 %v85
    %v121 = vpop.f32.mrb[0].mxu0
    %v122 = vadd.f32 %v81, %v121
    %v123 = vpop.f32.mrb[0].mxu0
    %v124 = vpop.f32.mrb[0].mxu0
    %v125 = vpop.f32.mrb[0].mxu0
    %126 = vdwg.mxu0
    %v127 = vmax.f32 %v122, 0.0
    %v128 = vpack.c.bf16 %v127, %v127
    %v129 = vld [vmem:[#allocation7] sm:$0xff]
    %v130 = vld [vmem:[#allocation7 + $0x8] sm:$0xff]
    %v131 = vld [vmem:[#allocation7 + $0x10] sm:$0xff]
    %v132 = vld [vmem:[#allocation7 + $0x18] sm:$0xff]
    %v133 = vld [vmem:[#allocation7 + $0x20] sm:$0xff]
    %v134 = vld [vmem:[#allocation7 + $0x28] sm:$0xff]
    %v135 = vld [vmem:[#allocation7 + $0x30] sm:$0xff]
    %v136 = vld [vmem:[#allocation7 + $0x38] sm:$0xff]
    %v137 = vld [vmem:[#allocation7 + $0x40] sm:$0xff]
    %v138 = vld [vmem:[#allocation7 + $0x48] sm:$0xff]
    %v139 = vld [vmem:[#allocation7 + $0x50] sm:$0xff]
    %v140 = vld [vmem:[#allocation7 + $0x58] sm:$0xff]
    %v141 = vld [vmem:[#allocation7 + $0x60] sm:$0xff]
    %v142 = vld [vmem:[#allocation7 + $0x68] sm:$0xff]
    %v143 = vld [vmem:[#allocation7 + $0x70] sm:$0xff]
    %v144 = vld [vmem:[#allocation7 + $0x78] sm:$0xff]
    %v145 = vpack.c.bf16 %v130, %v129
    %v146 = vpack.c.bf16 %v132, %v131
    %v147 = vpack.c.bf16 %v134, %v133
    %v148 = vpack.c.bf16 %v136, %v135
    %v149 = vpack.c.bf16 %v138, %v137
    %v150 = vpack.c.bf16 %v140, %v139
    %v151 = vpack.c.bf16 %v142, %v141
    %v152 = vpack.c.bf16 %v144, %v143
    %v153 = vld [vmem:[%s4] sm:$0x1]
    %v155 = vlaneseq
    %v156 = vshrl.u32 %v155, 7
    %v157 = vsub.s32 0, %v156
    %v158 = vrot.slane %v153, %v157
    %160 = vmatprep.subr.bf16.mxu0 0
    %161 = vmatpush1.bf16.msra.mxu0 %v145
    %162 = vmatprep.subr.bf16.mxu0 0
    %163 = vmatpush1.bf16.msra.mxu0 %v146
    %164 = vmatprep.subr.bf16.mxu0 0
    %165 = vmatpush1.bf16.msra.mxu0 %v147
    %166 = vmatprep.subr.bf16.mxu0 0
    %167 = vmatpush1.bf16.msra.mxu0 %v148
    %168 = vmatprep.subr.bf16.mxu0 0
    %169 = vmatpush1.bf16.msra.mxu0 %v149
    %170 = vmatprep.subr.bf16.mxu0 0
    %171 = vmatpush1.bf16.msra.mxu0 %v150
    %172 = vmatprep.subr.bf16.mxu0 0
    %173 = vmatpush1.bf16.msra.mxu0 %v151
    %174 = vmatprep.subr.bf16.mxu0 0
    %175 = vmatpush1.bf16.msra.mxu0 %v152
    %176 = vmatprep.subr.bf16.mxu0 0
    %177 = vmatpush1.bf16.msra.mxu0 0
    %178 = vmatprep.subr.bf16.mxu0 0
    %179 = vmatpush1.bf16.msra.mxu0 0
    %180 = vmatprep.subr.bf16.mxu0 0
    %181 = vmatpush1.bf16.msra.mxu0 0
    %182 = vmatprep.subr.bf16.mxu0 0
    %183 = vmatpush1.bf16.msra.mxu0 0
    %184 = vmatprep.subr.bf16.mxu0 0
    %185 = vmatpush1.bf16.msra.mxu0 0
    %186 = vmatprep.subr.bf16.mxu0 0
    %187 = vmatpush1.bf16.msra.mxu0 0
    %188 = vmatprep.subr.bf16.mxu0 0
    %189 = vmatpush1.bf16.msra.mxu0 0
    %190 = vmatprep.subr.bf16.mxu0 0
    %191 = vmatpush1.bf16.msra.mxu0 0
    %192 = vmatprep.mubr.bf16.mxu0 0
    %193 = vmatmul.mubr.bf16.gmra.mrb[0].mxu0 %v128
    %v194 = vpop.f32.mrb[0].mxu0
    %v195 = vadd.f32 %v158, %v194
    %v196 = vpop.f32.mrb[0].mxu0
    %v197 = vpop.f32.mrb[0].mxu0
    %v198 = vpop.f32.mrb[0].mxu0
    %199 = vdwg.mxu0
    %v200 = vmax.f32 %v195, 0.0
    %v201 = vld [vmem:[%s5] sm:$0x1]
    %v203 = vlaneseq
    %v204 = vshrl.u32 %v203, 7
    %v205 = vsub.s32 0, %v204
    %v206 = vrot.slane %v201, %v205
    %v208 = vmul.f32 %v200, %v206
    %209 = vadd.xlane.f32.xlu0 %v208
    %v210 = vpop.xlane.xlu0 %209
    %v211 = vld [vmem:[#allocation2] sm:$0x1]
    %v213 = vlaneseq
    %v214 = vshrl.u32 %v213, 7
    %v215 = vsub.s32 0, %v214
    %v216 = vrot.slane %v211, %v215
    %v218 = vadd.f32 %v210, %v216
    %vm219 = vcmask 7168
    %220 = vst.msk [vmem:[%s7] sm:$0xff] %vm219, %v218
    // Predicated region
    $region42: #{tpu_custom_call.1} parent=1 // pred_check
      _
    $region43: #{tpu_custom_call.1} parent=1 // pred_check_branch
      %222 = sbr.rel (0) target = $region45
    $region44: #{tpu_custom_call.1} parent=1 // pred_region
      _
    $region45: #{tpu_custom_call.1} parent=1 // pred_fallthru
      _
    // Predicated region
    $region46: #{tpu_custom_call.1} parent=1 // pred_check
      _
    $region47: #{tpu_custom_call.1} parent=1 // pred_check_branch
      %224 = sbr.rel (0) target = $region49
    $region48: #{tpu_custom_call.1} parent=1 // pred_region
      _
    $region49: #{tpu_custom_call.1} parent=1 // pred_fallthru
      _
    %225 = vsyncpa [#allocation4], 1
    %226 = vsyncpa [#allocation6], 1

</llo_original>
